<compile_context>
chip_gen: v7x
topology: tpu7x:2x2x1
jax: 0.10.0
libtpu: 0.0.40
codegen_flags: <defaults>
</compile_context>

<pallas_src>
import functools
from typing import Dict, List, Optional, Tuple

import jax
import jax.numpy as jnp
from jax.experimental import pallas as pl
from jax.experimental.pallas import tpu as pltpu


def _round_up(x: int, m: int) -> int:
    return ((x + m - 1) // m) * m


# Lanes per grid step (see header comment for the roofline / VMEM arithmetic).
_ROW_TILE_CAP = 32 * 1024
# Below this batch size, fused XLA beats the kernel's fixed costs.
_SMALL_N_THRESHOLD = 16 * 1024


def _adaptive_stats_kernel(pt_ref, feat_ref,
                           psq_ref, pst_ref, psf_ref, psft_ref,
                           acc_sq, acc_t, acc_f, acc_ft):
    """Streaming sufficient-statistics kernel (one core's share of N).

    pt_ref   : (2, T)      predictions (row 0) / target (row 1), native dtype
    feat_ref : (F_pad, T)  features^T tile (features on sublanes), native dtype
    psq_ref  : (1, 1)      per-core partial sum((p-t)^2)         [f32 out]
    pst_ref  : (1, 1)      per-core partial sum(t)               [f32 out]
    psf_ref  : (F_pad, 1)  per-core partial sum(f)               [f32 out]
    psft_ref : (F_pad, 1)  per-core partial sum(f*t)             [f32 out]
    acc_*    : f32 VMEM accumulators, resident across the inner grid axis.
    """
    j = pl.program_id(1)

    @pl.when(j == 0)
    def _init():
        acc_sq[...] = jnp.zeros_like(acc_sq)
        acc_t[...] = jnp.zeros_like(acc_t)
        acc_f[...] = jnp.zeros_like(acc_f)
        acc_ft[...] = jnp.zeros_like(acc_ft)

    pred = pt_ref[0:1, :].astype(jnp.float32)   # (1, T)  static view + cast
    targ = pt_ref[1:2, :].astype(jnp.float32)   # (1, T)
    feat = feat_ref[...].astype(jnp.float32)    # (F_pad, T)

    diff = pred - targ
    acc_sq[...] += jnp.sum(diff * diff, axis=-1, keepdims=True)   # (1, 1)
    acc_t[...] += jnp.sum(targ, axis=-1, keepdims=True)           # (1, 1)
    acc_f[...] += jnp.sum(feat, axis=-1, keepdims=True)           # (F_pad, 1)
    acc_ft[...] += jnp.sum(feat * targ, axis=-1, keepdims=True)   # (F_pad, 1)

    @pl.when(j == pl.num_programs(1) - 1)
    def _finalize():
        psq_ref[...] = acc_sq[...]
        pst_ref[...] = acc_t[...]
        psf_ref[...] = acc_f[...]
        psft_ref[...] = acc_ft[...]


@jax.jit
def adaptive_loss_pallas(predictions: jax.Array,
                         target: jax.Array,
                         features: jax.Array,
                         weights: jax.Array) -> Tuple[jax.Array, jax.Array]:
    """predictions, target: (N, 1) or (N,); features: (N, F); weights: (F,).

    Returns (total_loss scalar, |covariance| per feature of shape (F,)).
    """
    n, f = features.shape
    f_pad = max(8, _round_up(f, 8))

    # Balanced tiling: even number of row tiles so the leading "parallel" grid
    # axis (size 2) splits N across both TensorCores on v7x; padding waste is
    # capped at < 128 rows per tile.
    num_tiles = _round_up(max(2, pl.cdiv(n, _ROW_TILE_CAP)), 2)
    tile_n = max(128, _round_up(pl.cdiv(n, num_tiles), 128))
    tiles_per_core = num_tiles // 2
    n_pad = num_tiles * tile_n

    # Lane-dense layouts in the inputs' *native* dtype (cast to f32 in-kernel).
    # Predictions + target packed into one (2, N_pad) array -> one DMA stream.
    # Zero padding keeps every accumulated sum exact; division uses true N.
    # NOTE: features.T (+pad) is one extra XLA pass over the feature matrix;
    # callers that can produce (F, N)-major features avoid it.
    pt = jnp.concatenate(
        [predictions.reshape(1, n), target.reshape(1, n)], axis=0)
    pt = jnp.pad(pt, ((0, 0), (0, n_pad - n)))
    feat_t = jnp.pad(features.T, ((0, f_pad - f), (0, n_pad - n)))

    tpc = tiles_per_core
    part_sq, part_t, part_f, part_ft = pl.pallas_call(
        _adaptive_stats_kernel,
        out_shape=(
            jax.ShapeDtypeStruct((2, 1, 1), jnp.float32),       # sum (p-t)^2
            jax.ShapeDtypeStruct((2, 1, 1), jnp.float32),       # sum t
            jax.ShapeDtypeStruct((2, f_pad, 1), jnp.float32),   # sum f
            jax.ShapeDtypeStruct((2, f_pad, 1), jnp.float32),   # sum f*t
        ),
        grid_spec=pltpu.PrefetchScalarGridSpec(
            num_scalar_prefetch=0,
            grid=(2, tiles_per_core),
            in_specs=[
                pl.BlockSpec((2, tile_n), lambda i, j: (0, i * tpc + j)),
                pl.BlockSpec((f_pad, tile_n), lambda i, j: (0, i * tpc + j)),
            ],
            out_specs=(
                pl.BlockSpec((None, 1, 1), lambda i, j: (i, 0, 0)),
                pl.BlockSpec((None, 1, 1), lambda i, j: (i, 0, 0)),
                pl.BlockSpec((None, f_pad, 1), lambda i, j: (i, 0, 0)),
                pl.BlockSpec((None, f_pad, 1), lambda i, j: (i, 0, 0)),
            ),
            scratch_shapes=[
                pltpu.VMEM((1, 1), jnp.float32),       # sum (p-t)^2
                pltpu.VMEM((1, 1), jnp.float32),       # sum t
                pltpu.VMEM((f_pad, 1), jnp.float32),   # sum f
                pltpu.VMEM((f_pad, 1), jnp.float32),   # sum f*t
            ],
        ),
        compiler_params=pltpu.CompilerParams(
            dimension_semantics=("parallel", "arbitrary"),
        ),
    )(pt, feat_t)

    # Tiny XLA epilogue: combine the two per-core partial sums and finalize.
    inv_n = jnp.float32(1.0 / n)
    mse = jnp.sum(part_sq) * inv_n
    mean_t = jnp.sum(part_t) * inv_n
    mean_f = jnp.sum(part_f, axis=0)[:, 0] * inv_n      # (f_pad,)
    mean_ft = jnp.sum(part_ft, axis=0)[:, 0] * inv_n    # (f_pad,)
    cov = jnp.abs(mean_ft - mean_f * mean_t)[:f]        # (F,)
    total = mse + jnp.sum(weights.astype(jnp.float32) * cov)
    return total, cov


@jax.jit
def adaptive_loss_xla(predictions: jax.Array,
                      target: jax.Array,
                      features: jax.Array,
                      weights: jax.Array) -> Tuple[jax.Array, jax.Array]:
    """Fused-XLA path for small batches (kernel fixed costs dominate there)."""
    p = predictions.reshape(-1).astype(jnp.float32)
    t = target.reshape(-1).astype(jnp.float32)
    x = features.astype(jnp.float32)
    mse = jnp.mean((p - t) ** 2)
    tc = t - jnp.mean(t)
    cov = jnp.abs(jnp.mean((x - jnp.mean(x, axis=0)) * tc[:, None], axis=0))
    total = mse + jnp.sum(weights.astype(jnp.float32) * cov)
    return total, cov


def adaptive_loss(predictions, target, features, weights,
                  use_pallas: Optional[bool] = None):
    """Dispatcher: Pallas streaming kernel for large N, fused XLA otherwise."""
    n = features.shape[0]
    if use_pallas is None:
        use_pallas = n >= _SMALL_N_THRESHOLD
    fn = adaptive_loss_pallas if use_pallas else adaptive_loss_xla
    return fn(predictions, target, features, weights)


class AdaptiveLossFunctionJAX:
    """JAX/Pallas port of the PyTorch AdaptiveLossFunction forward pass."""

    def __init__(self, feature_names: List[str],
                 initial_weights: Dict[str, float] = None):
        self.feature_names = feature_names
        if initial_weights is None:
            self.weights = {name: (0.1 if i == 0 else 0.05)
                            for i, name in enumerate(feature_names)}
        else:
            self.weights = initial_weights.copy()
        self.min_weight = 0.01
        self.max_weight = 0.5
        # One device array per forward call (no per-feature dispatch/sync).
        self.covariance_history: List[jax.Array] = []
        self.weight_history = {name: [] for name in feature_names}

    def forward(self, predictions, target, features):
        w = jnp.asarray([self.weights[name] for name in self.feature_names],
                        dtype=jnp.float32)
        total_loss, covs = adaptive_loss(
            jnp.asarray(predictions), jnp.asarray(target),
            jnp.asarray(features), w)
        self.covariance_history.append(covs)
        return total_loss, covs

    def correlation_losses(self, covs) -> Dict[str, float]:
        """Materialize the per-feature dict (host sync) — call sparingly."""
        covs_host = jax.device_get(covs)
        return {name: float(covs_host[i])
                for i, name in enumerate(self.feature_names)}

    def covariance_history_by_feature(self) -> Dict[str, List[float]]:
        """Materialize the full history as a dict-of-lists (host sync)."""
        host = [jax.device_get(c) for c in self.covariance_history]
        return {name: [float(c[i]) for c in host]
                for i, name in enumerate(self.feature_names)}


def _reference(predictions, target, features, w):
    p = jnp.asarray(predictions, jnp.float32).reshape(-1)
    t = jnp.asarray(target, jnp.float32).reshape(-1)
    x = jnp.asarray(features, jnp.float32)
    mse_ref = jnp.mean((p - t) ** 2)
    tc = t - jnp.mean(t)
    cov_ref = jnp.abs(jnp.mean((x - jnp.mean(x, axis=0)) * tc[:, None], axis=0))
    total_ref = mse_ref + jnp.sum(w * cov_ref)
    return total_ref, cov_ref


if __name__ == "__main__":
    key = jax.random.PRNGKey(0)
    k1, k2, k3 = jax.random.split(key, 3)

    # Small shapes consistent with the module: batch=8 samples, 4 features.
    N, F = 8, 4
    feature_names = [f"feat_{i}" for i in range(F)]

    features = jax.random.normal(k1, (N, F), dtype=jnp.float32)
    target = jax.random.normal(k2, (N, 1), dtype=jnp.float32)
    predictions = target + 0.1 * jax.random.normal(k3, (N, 1), dtype=jnp.float32)

    loss_fn = AdaptiveLossFunctionJAX(feature_names)
    w_vec = jnp.asarray([loss_fn.weights[name] for name in feature_names],
                        jnp.float32)

    # Force the Pallas kernel at the module's small shapes and check it.
    total_k, cov_k = adaptive_loss(predictions, target, features, w_vec,
                                   use_pallas=True)
    total_k, cov_k = jax.block_until_ready((total_k, cov_k))
    total_r, cov_r = _reference(predictions, target, features, w_vec)
    assert jnp.allclose(cov_k, cov_r, rtol=1e-4, atol=1e-6), (cov_k, cov_r)
    assert jnp.allclose(total_k, total_r, rtol=1e-4, atol=1e-6), (total_k, total_r)

    # Module forward (auto dispatch -> fused XLA fallback at this size).
    total_m, cov_m = loss_fn.forward(predictions, target, features)
    jax.block_until_ready((total_m, cov_m))
    assert jnp.allclose(total_m, total_r, rtol=1e-4, atol=1e-6), (total_m, total_r)

    # Larger, non-tile-aligned batch: exercises balanced tiles, the 2-way
    # parallel core split and multiple inner grid steps per core.
    k4, k5, k6 = jax.random.split(jax.random.PRNGKey(1), 3)
    N2 = 200_000
    t2 = jax.random.normal(k5, (N2, 1), dtype=jnp.float32)
    f2 = 0.5 * t2 + jax.random.normal(k4, (N2, F), dtype=jnp.float32)
    p2 = t2 + 0.1 * jax.random.normal(k6, (N2, 1), dtype=jnp.float32)
    tl2, cv2 = adaptive_loss(p2, t2, f2, w_vec)   # auto -> Pallas path
    tl2, cv2 = jax.block_until_ready((tl2, cv2))
    tr2, cr2 = _reference(p2, t2, f2, w_vec)
    assert jnp.allclose(cv2, cr2, rtol=1e-3, atol=1e-4), (cv2, cr2)
    assert jnp.allclose(tl2, tr2, rtol=1e-3, atol=1e-4), (tl2, tr2)

    print("KERNEL_OK")
</pallas_src>

<mosaic_0001>
module attributes {stable_mosaic.version = 11 : i64} {
  func.func @_adaptive_stats_kernel(%arg0: i32, %arg1: i32, %arg2: memref<2x128xf32, #tpu.memory_space<vmem>>, %arg3: memref<8x128xf32, #tpu.memory_space<vmem>>, %arg4: memref<1x1x1xf32, #tpu.memory_space<vmem>>, %arg5: memref<1x1x1xf32, #tpu.memory_space<vmem>>, %arg6: memref<1x8x1xf32, #tpu.memory_space<vmem>>, %arg7: memref<1x8x1xf32, #tpu.memory_space<vmem>>, %arg8: memref<1x1xf32, #tpu.memory_space<vmem>>, %arg9: memref<1x1xf32, #tpu.memory_space<vmem>>, %arg10: memref<8x1xf32, #tpu.memory_space<vmem>>, %arg11: memref<8x1xf32, #tpu.memory_space<vmem>>) attributes {dimension_semantics = [#tpu.dimension_semantics<parallel>, #tpu.dimension_semantics<arbitrary>], iteration_bounds = array<i64: 2, 1>, scalar_prefetch = 0 : i64, scratch_operands = 4 : i64, tpu.core_type = #tpu.core_type<tc>, window_params = [{transform_indices = @transform_0, window_bounds = array<i64: 2, 128>}, {transform_indices = @transform_1, window_bounds = array<i64: 8, 128>}, {transform_indices = @transform_2, window_bounds = array<i64: 1, 1, 1>}, {transform_indices = @transform_3, window_bounds = array<i64: 1, 1, 1>}, {transform_indices = @transform_4, window_bounds = array<i64: 1, 8, 1>}, {transform_indices = @transform_5, window_bounds = array<i64: 1, 8, 1>}]} {
    %c0_i32 = arith.constant 0 : i32
    %0 = arith.cmpi eq, %arg1, %c0_i32 : i32
    %1 = arith.extui %0 : i1 to i32
    %c0_i32_0 = arith.constant 0 : i32
    %2 = arith.cmpi ne, %1, %c0_i32_0 : i32
    scf.if %2 {
      %cst_26 = arith.constant 0.000000e+00 : f32
      %33 = vector.broadcast %cst_26 : f32 to vector<1x1xf32>
      %c0_27 = arith.constant 0 : index
      %c0_28 = arith.constant 0 : index
      %34 = vector.load %arg8[%c0_27, %c0_28] : memref<1x1xf32, #tpu.memory_space<vmem>>, vector<1x1xf32>
      tpu.vector_store %arg8[%c0_27, %c0_28], %33 {strides = array<i32>} : memref<1x1xf32, #tpu.memory_space<vmem>>, vector<1x1xf32>,
      %cst_29 = arith.constant 0.000000e+00 : f32
      %35 = vector.broadcast %cst_29 : f32 to vector<1x1xf32>
      %c0_30 = arith.constant 0 : index
      %c0_31 = arith.constant 0 : index
      %36 = vector.load %arg9[%c0_30, %c0_31] : memref<1x1xf32, #tpu.memory_space<vmem>>, vector<1x1xf32>
      tpu.vector_store %arg9[%c0_30, %c0_31], %35 {strides = array<i32>} : memref<1x1xf32, #tpu.memory_space<vmem>>, vector<1x1xf32>,
      %cst_32 = arith.constant 0.000000e+00 : f32
      %37 = vector.broadcast %cst_32 : f32 to vector<8x1xf32>
      %c0_33 = arith.constant 0 : index
      %c0_34 = arith.constant 0 : index
      %38 = vector.load %arg10[%c0_33, %c0_34] : memref<8x1xf32, #tpu.memory_space<vmem>>, vector<8x1xf32>
      tpu.vector_store %arg10[%c0_33, %c0_34], %37 {strides = array<i32>} : memref<8x1xf32, #tpu.memory_space<vmem>>, vector<8x1xf32>,
      %cst_35 = arith.constant 0.000000e+00 : f32
      %39 = vector.broadcast %cst_35 : f32 to vector<8x1xf32>
      %c0_36 = arith.constant 0 : index
      %c0_37 = arith.constant 0 : index
      %40 = vector.load %arg11[%c0_36, %c0_37] : memref<8x1xf32, #tpu.memory_space<vmem>>, vector<8x1xf32>
      tpu.vector_store %arg11[%c0_36, %c0_37], %39 {strides = array<i32>} : memref<8x1xf32, #tpu.memory_space<vmem>>, vector<8x1xf32>,
    } else {
    }
    %c0 = arith.constant 0 : index
    %c0_1 = arith.constant 0 : index
    %3 = vector.load %arg2[%c0, %c0_1] : memref<2x128xf32, #tpu.memory_space<vmem>>, vector<1x128xf32>
    %c1 = arith.constant 1 : index
    %c0_2 = arith.constant 0 : index
    %4 = vector.load %arg2[%c1, %c0_2] : memref<2x128xf32, #tpu.memory_space<vmem>>, vector<1x128xf32>
    %c0_3 = arith.constant 0 : index
    %c0_4 = arith.constant 0 : index
    %5 = vector.load %arg3[%c0_3, %c0_4] : memref<8x128xf32, #tpu.memory_space<vmem>>, vector<8x128xf32>
    %6 = arith.subf %3, %4 : vector<1x128xf32>
    %c0_5 = arith.constant 0 : index
    %c0_6 = arith.constant 0 : index
    %7 = vector.load %arg8[%c0_5, %c0_6] : memref<1x1xf32, #tpu.memory_space<vmem>>, vector<1x1xf32>
    %8 = arith.mulf %6, %6 : vector<1x128xf32>
    %cst = arith.constant dense<0.000000e+00> : vector<1xf32>
    %9 = vector.multi_reduction <add>, %8, %cst [1] : vector<1x128xf32> to vector<1xf32>
    %10 = vector.shape_cast %9 : vector<1xf32> to vector<1x1xf32>
    %11 = arith.addf %7, %10 : vector<1x1xf32>
    %c0_7 = arith.constant 0 : index
    %c0_8 = arith.constant 0 : index
    %12 = vector.load %arg8[%c0_7, %c0_8] : memref<1x1xf32, #tpu.memory_space<vmem>>, vector<1x1xf32>
    tpu.vector_store %arg8[%c0_7, %c0_8], %11 {strides = array<i32>} : memref<1x1xf32, #tpu.memory_space<vmem>>, vector<1x1xf32>,
    %c0_9 = arith.constant 0 : index
    %c0_10 = arith.constant 0 : index
    %13 = vector.load %arg9[%c0_9, %c0_10] : memref<1x1xf32, #tpu.memory_space<vmem>>, vector<1x1xf32>
    %cst_11 = arith.constant dense<0.000000e+00> : vector<1xf32>
    %14 = vector.multi_reduction <add>, %4, %cst_11 [1] : vector<1x128xf32> to vector<1xf32>
    %15 = vector.shape_cast %14 : vector<1xf32> to vector<1x1xf32>
    %16 = arith.addf %13, %15 : vector<1x1xf32>
    %c0_12 = arith.constant 0 : index
    %c0_13 = arith.constant 0 : index
    %17 = vector.load %arg9[%c0_12, %c0_13] : memref<1x1xf32, #tpu.memory_space<vmem>>, vector<1x1xf32>
    tpu.vector_store %arg9[%c0_12, %c0_13], %16 {strides = array<i32>} : memref<1x1xf32, #tpu.memory_space<vmem>>, vector<1x1xf32>,
    %c0_14 = arith.constant 0 : index
    %c0_15 = arith.constant 0 : index
    %18 = vector.load %arg10[%c0_14, %c0_15] : memref<8x1xf32, #tpu.memory_space<vmem>>, vector<8x1xf32>
    %cst_16 = arith.constant dense<0.000000e+00> : vector<8xf32>
    %19 = vector.multi_reduction <add>, %5, %cst_16 [1] : vector<8x128xf32> to vector<8xf32>
    %20 = vector.shape_cast %19 : vector<8xf32> to vector<8x1xf32>
    %21 = arith.addf %18, %20 : vector<8x1xf32>
    %c0_17 = arith.constant 0 : index
    %c0_18 = arith.constant 0 : index
    %22 = vector.load %arg10[%c0_17, %c0_18] : memref<8x1xf32, #tpu.memory_space<vmem>>, vector<8x1xf32>
    tpu.vector_store %arg10[%c0_17, %c0_18], %21 {strides = array<i32>} : memref<8x1xf32, #tpu.memory_space<vmem>>, vector<8x1xf32>,
    %c0_19 = arith.constant 0 : index
    %c0_20 = arith.constant 0 : index
    %23 = vector.load %arg11[%c0_19, %c0_20] : memref<8x1xf32, #tpu.memory_space<vmem>>, vector<8x1xf32>
    %24 = vector.broadcast %4 : vector<1x128xf32> to vector<8x128xf32>
    %25 = arith.mulf %5, %24 : vector<8x128xf32>
    %cst_21 = arith.constant dense<0.000000e+00> : vector<8xf32>
    %26 = vector.multi_reduction <add>, %25, %cst_21 [1] : vector<8x128xf32> to vector<8xf32>
    %27 = vector.shape_cast %26 : vector<8xf32> to vector<8x1xf32>
    %28 = arith.addf %23, %27 : vector<8x1xf32>
    %c0_22 = arith.constant 0 : index
    %c0_23 = arith.constant 0 : index
    %29 = vector.load %arg11[%c0_22, %c0_23] : memref<8x1xf32, #tpu.memory_space<vmem>>, vector<8x1xf32>
    tpu.vector_store %arg11[%c0_22, %c0_23], %28 {strides = array<i32>} : memref<8x1xf32, #tpu.memory_space<vmem>>, vector<8x1xf32>,
    %c0_i32_24 = arith.constant 0 : i32
    %30 = arith.cmpi eq, %arg1, %c0_i32_24 : i32
    %31 = arith.extui %30 : i1 to i32
    %c0_i32_25 = arith.constant 0 : i32
    %32 = arith.cmpi ne, %31, %c0_i32_25 : i32
    scf.if %32 {
      %c0_26 = arith.constant 0 : index
      %c0_27 = arith.constant 0 : index
      %33 = vector.load %arg8[%c0_26, %c0_27] : memref<1x1xf32, #tpu.memory_space<vmem>>, vector<1x1xf32>
      %c0_28 = arith.constant 0 : index
      %c0_29 = arith.constant 0 : index
      %c0_30 = arith.constant 0 : index
      %34 = vector.load %arg4[%c0_28, %c0_29, %c0_30] : memref<1x1x1xf32, #tpu.memory_space<vmem>>, vector<1x1x1xf32>
      %35 = vector.shape_cast %34 : vector<1x1x1xf32> to vector<1x1xf32>
      %36 = vector.shape_cast %33 : vector<1x1xf32> to vector<1x1x1xf32>
      tpu.vector_store %arg4[%c0_28, %c0_29, %c0_30], %36 {strides = array<i32>} : memref<1x1x1xf32, #tpu.memory_space<vmem>>, vector<1x1x1xf32>,
      %c0_31 = arith.constant 0 : index
      %c0_32 = arith.constant 0 : index
      %37 = vector.load %arg9[%c0_31, %c0_32] : memref<1x1xf32, #tpu.memory_space<vmem>>, vector<1x1xf32>
      %c0_33 = arith.constant 0 : index
      %c0_34 = arith.constant 0 : index
      %c0_35 = arith.constant 0 : index
      %38 = vector.load %arg5[%c0_33, %c0_34, %c0_35] : memref<1x1x1xf32, #tpu.memory_space<vmem>>, vector<1x1x1xf32>
      %39 = vector.shape_cast %38 : vector<1x1x1xf32> to vector<1x1xf32>
      %40 = vector.shape_cast %37 : vector<1x1xf32> to vector<1x1x1xf32>
      tpu.vector_store %arg5[%c0_33, %c0_34, %c0_35], %40 {strides = array<i32>} : memref<1x1x1xf32, #tpu.memory_space<vmem>>, vector<1x1x1xf32>,
      %c0_36 = arith.constant 0 : index
      %c0_37 = arith.constant 0 : index
      %41 = vector.load %arg10[%c0_36, %c0_37] : memref<8x1xf32, #tpu.memory_space<vmem>>, vector<8x1xf32>
      %c0_38 = arith.constant 0 : index
      %c0_39 = arith.constant 0 : index
      %c0_40 = arith.constant 0 : index
      %42 = vector.load %arg6[%c0_38, %c0_39, %c0_40] : memref<1x8x1xf32, #tpu.memory_space<vmem>>, vector<1x8x1xf32>
      %43 = vector.shape_cast %42 : vector<1x8x1xf32> to vector<8x1xf32>
      %44 = vector.shape_cast %41 : vector<8x1xf32> to vector<1x8x1xf32>
      tpu.vector_store %arg6[%c0_38, %c0_39, %c0_40], %44 {strides = array<i32>} : memref<1x8x1xf32, #tpu.memory_space<vmem>>, vector<1x8x1xf32>,
      %c0_41 = arith.constant 0 : index
      %c0_42 = arith.constant 0 : index
      %45 = vector.load %arg11[%c0_41, %c0_42] : memref<8x1xf32, #tpu.memory_space<vmem>>, vector<8x1xf32>
      %c0_43 = arith.constant 0 : index
      %c0_44 = arith.constant 0 : index
      %c0_45 = arith.constant 0 : index
      %46 = vector.load %arg7[%c0_43, %c0_44, %c0_45] : memref<1x8x1xf32, #tpu.memory_space<vmem>>, vector<1x8x1xf32>
      %47 = vector.shape_cast %46 : vector<1x8x1xf32> to vector<8x1xf32>
      %48 = vector.shape_cast %45 : vector<8x1xf32> to vector<1x8x1xf32>
      tpu.vector_store %arg7[%c0_43, %c0_44, %c0_45], %48 {strides = array<i32>} : memref<1x8x1xf32, #tpu.memory_space<vmem>>, vector<1x8x1xf32>,
    } else {
    }
    return
  }
  func.func @transform_0(%arg0: i32, %arg1: i32) -> (i32, i32) {
    %c1_i32 = arith.constant 1 : i32
    %0 = arith.muli %arg0, %c1_i32 : i32
    %1 = arith.addi %0, %arg1 : i32
    %c0_i32 = arith.constant 0 : i32
    %c0_i32_0 = arith.constant 0 : i32
    return %c0_i32, %1 : i32, i32
  }
  func.func @transform_1(%arg0: i32, %arg1: i32) -> (i32, i32) {
    %c1_i32 = arith.constant 1 : i32
    %0 = arith.muli %arg0, %c1_i32 : i32
    %1 = arith.addi %0, %arg1 : i32
    %c0_i32 = arith.constant 0 : i32
    %c0_i32_0 = arith.constant 0 : i32
    return %c0_i32, %1 : i32, i32
  }
  func.func @transform_2(%arg0: i32, %arg1: i32) -> (i32, i32, i32) {
    %c0_i32 = arith.constant 0 : i32
    %c0_i32_0 = arith.constant 0 : i32
    %c0_i32_1 = arith.constant 0 : i32
    return %arg0, %c0_i32, %c0_i32_0 : i32, i32, i32
  }
  func.func @transform_3(%arg0: i32, %arg1: i32) -> (i32, i32, i32) {
    %c0_i32 = arith.constant 0 : i32
    %c0_i32_0 = arith.constant 0 : i32
    %c0_i32_1 = arith.constant 0 : i32
    return %arg0, %c0_i32, %c0_i32_0 : i32, i32, i32
  }
  func.func @transform_4(%arg0: i32, %arg1: i32) -> (i32, i32, i32) {
    %c0_i32 = arith.constant 0 : i32
    %c0_i32_0 = arith.constant 0 : i32
    %c0_i32_1 = arith.constant 0 : i32
    return %arg0, %c0_i32, %c0_i32_0 : i32, i32, i32
  }
  func.func @transform_5(%arg0: i32, %arg1: i32) -> (i32, i32, i32) {
    %c0_i32 = arith.constant 0 : i32
    %c0_i32_0 = arith.constant 0 : i32
    %c0_i32_1 = arith.constant 0 : i32
    return %arg0, %c0_i32, %c0_i32_0 : i32, i32, i32
  }
}

</mosaic_0001>

<llo_original>
// kernel: adaptive_loss_pallas.1
$region0: #{adaptive_loss_pallas.1}
  #allocation0 [shape = 'u32[]', space=smem, size = 0x4, offset = 0x4, fixed_abs, tag = 'smem constant byte address 0x4 - core index']
  #allocation1 [shape = 'u32[144,128]{1,0:T(1,128)}', space=vmem, size = 0x12000, scoped, tag = 'internal scratch']
  #allocation2 [shape = 'f32[1,1]{1,0:T(1,128)}', space=vmem, size = 0x200, scoped, tag = 'scratch operand']
  #allocation3 [shape = 'f32[1,1]{1,0:T(1,128)}', space=vmem, size = 0x200, scoped, tag = 'scratch operand']
  #allocation4 [shape = 'f32[8,1]{1,0:T(8,128)}', space=vmem, size = 0x1000, scoped, tag = 'scratch operand']
  #allocation5 [shape = 'f32[8,1]{1,0:T(8,128)}', space=vmem, size = 0x1000, scoped, tag = 'scratch operand']
  %s0 = inlined_call_operand.vmem [shape: f32[2,256], index: 0, kind: input, shape index: {}]
  %s1 = inlined_call_operand.vmem [shape: f32[8,256], index: 1, kind: input, shape index: {}]
  %s2 = inlined_call_operand.vmem [shape: f32[2,1,1], index: 2, kind: output, shape index: {0}]
  %s3 = inlined_call_operand.vmem [shape: f32[2,1,1], index: 3, kind: output, shape index: {1}]
  %s4 = inlined_call_operand.vmem [shape: f32[2,8,1], index: 4, kind: output, shape index: {2}]
  %s5 = inlined_call_operand.vmem [shape: f32[2,8,1], index: 5, kind: output, shape index: {3}]
  %6 = xla_tuple %s2, %s3, %s4, %s5
  %s7 = sld [smem:[#allocation0]]
  $region73: #{adaptive_loss_pallas.1} parent=0
    _
  %s9 = ssub.s32 1, %s7
  %s10 = scalar_select 0, %s9, %s7
  loop: start=0, step=1, limit=4
  $region2: #{adaptive_loss_pallas.1} parent=0 // loop_pre_header
    _
  $region3: #{adaptive_loss_pallas.1} parent=0 // loop_header
    %s12 = sphi 0, %s16
    %p13 = scmp.ge.s32.totalorder %s12, 4
    %s19 = sphi 0, %s31
    %s20 = sphi 0, %s27
    %s21 = sphi 0, %s19
    %s22 = sphi 0, %s20
    %s23 = sphi 0, %s21
    %s24 = sphi 0, %s22
    %s36 = sphi 0, %s38
    %s39 = sphi 0, %s36
    %s40 = sphi 0, %s39
    %s56 = sphi 0, %s40
    %s64 = sphi 0, %s66
    %s67 = sphi 0, %s64
    %s68 = sphi 0, %s67
    %s84 = sphi 0, %s68
    %s90 = sphi 0, %s92
    %s93 = sphi 0, %s90
    %s94 = sphi 0, %s93
    %s110 = sphi 0, %s94
    %s116 = sphi 0, %s118
    %s119 = sphi 0, %s116
    %s120 = sphi 0, %s119
    %s136 = sphi 0, %s120
    %s142 = sphi 0, %s144
    %s145 = sphi 0, %s142
    %s146 = sphi 0, %s145
    %s162 = sphi 0, %s146
    %s168 = sphi 0, %s170
    %s171 = sphi 0, %s168
    %s172 = sphi 0, %s171
    %s188 = sphi 0, %s172
  $region4: #{adaptive_loss_pallas.1} parent=0 // loop_header_branch
    %15 = sbr.rel (%p13) target = $region8
  $region5: #{adaptive_loss_pallas.1} parent=0 // loop_body
    %s17 = ssub.s32 %s12, 1
    %s18 = ssub.s32 %s12, 2
    %s25 = sadd.s32 1, %s20
    %p26 = scmp.ge.s32.totalorder %s25, 1
    %s27 = scalar_select %p26, 0, %s25
    %s28 = sadd.s32 1, %s19
    %s29 = scalar_select %p26, %s28, %s19
    %p30 = scmp.ge.s32.totalorder %s29, 2
    %s31 = scalar_select %p30, 0, %s29
    %s32 = sadd.s32 %s19, %s20
    %s33 = sadd.s32 %s31, %s27
    %s34 = ssub.s32 %s32, %s33
    %p35 = scmp.eq.s32.totalorder %s34, 0
    %s37 = sadd.s32 %s36, 1
    %s38 = scalar_select %p35, %s36, %s37
    %p41 = pneg %p35
    %p42 = scmp.eq.s32.totalorder %s12, 1
    %p43 = por %p41, %p42
    %p44 = scmp.ne.s32.totalorder %s36, %s39
    %p45 = scmp.eq.s32.totalorder %s12, 0
    %p46 = por %p44, %p45
    %p47 = scmp.ne.s32.totalorder %s36, %s39
    %p48 = scmp.eq.s32.totalorder %s17, 1
    %p49 = por %p47, %p48
    %p50 = scmp.ne.s32.totalorder %s39, %s40
    %p51 = scmp.eq.s32.totalorder %s17, 0
    %p52 = por %p50, %p51
    %p53 = scmp.ne.s32.totalorder %s39, %s40
    %p54 = scmp.eq.s32.totalorder %s18, 1
    %p55 = por %p53, %p54
    %p57 = scmp.ne.s32.totalorder %s40, %s56
    %p58 = scmp.eq.s32.totalorder %s18, 0
    %p59 = por %p57, %p58
    %s60 = sadd.s32 %s19, %s20
    %s61 = sadd.s32 %s31, %s27
    %s62 = ssub.s32 %s60, %s61
    %p63 = scmp.eq.s32.totalorder %s62, 0
    %s65 = sadd.s32 %s64, 1
    %s66 = scalar_select %p63, %s64, %s65
    %p69 = pneg %p63
    %p70 = scmp.eq.s32.totalorder %s12, 1
    %p71 = por %p69, %p70
    %p72 = scmp.ne.s32.totalorder %s64, %s67
    %p73 = scmp.eq.s32.totalorder %s12, 0
    %p74 = por %p72, %p73
    %p75 = scmp.ne.s32.totalorder %s64, %s67
    %p76 = scmp.eq.s32.totalorder %s17, 1
    %p77 = por %p75, %p76
    %p78 = scmp.ne.s32.totalorder %s67, %s68
    %p79 = scmp.eq.s32.totalorder %s17, 0
    %p80 = por %p78, %p79
    %p81 = scmp.ne.s32.totalorder %s67, %s68
    %p82 = scmp.eq.s32.totalorder %s18, 1
    %p83 = por %p81, %p82
    %p85 = scmp.ne.s32.totalorder %s68, %s84
    %p86 = scmp.eq.s32.totalorder %s18, 0
    %p87 = por %p85, %p86
    %s88 = ssub.s32 %s19, %s31
    %p89 = scmp.eq.s32.totalorder %s88, 0
    %s91 = sadd.s32 %s90, 1
    %s92 = scalar_select %p89, %s90, %s91
    %p95 = pneg %p89
    %p96 = scmp.eq.s32.totalorder %s12, 1
    %p97 = por %p95, %p96
    %p98 = scmp.ne.s32.totalorder %s90, %s93
    %p99 = scmp.eq.s32.totalorder %s12, 0
    %p100 = por %p98, %p99
    %p101 = scmp.ne.s32.totalorder %s90, %s93
    %p102 = scmp.eq.s32.totalorder %s17, 1
    %p103 = por %p101, %p102
    %p104 = scmp.ne.s32.totalorder %s93, %s94
    %p105 = scmp.eq.s32.totalorder %s17, 0
    %p106 = por %p104, %p105
    %p107 = scmp.ne.s32.totalorder %s93, %s94
    %p108 = scmp.eq.s32.totalorder %s18, 1
    %p109 = por %p107, %p108
    %p111 = scmp.ne.s32.totalorder %s94, %s110
    %p112 = scmp.eq.s32.totalorder %s18, 0
    %p113 = por %p111, %p112
    %s114 = ssub.s32 %s19, %s31
    %p115 = scmp.eq.s32.totalorder %s114, 0
    %s117 = sadd.s32 %s116, 1
    %s118 = scalar_select %p115, %s116, %s117
    %p121 = pneg %p115
    %p122 = scmp.eq.s32.totalorder %s12, 1
    %p123 = por %p121, %p122
    %p124 = scmp.ne.s32.totalorder %s116, %s119
    %p125 = scmp.eq.s32.totalorder %s12, 0
    %p126 = por %p124, %p125
    %p127 = scmp.ne.s32.totalorder %s116, %s119
    %p128 = scmp.eq.s32.totalorder %s17, 1
    %p129 = por %p127, %p128
    %p130 = scmp.ne.s32.totalorder %s119, %s120
    %p131 = scmp.eq.s32.totalorder %s17, 0
    %p132 = por %p130, %p131
    %p133 = scmp.ne.s32.totalorder %s119, %s120
    %p134 = scmp.eq.s32.totalorder %s18, 1
    %p135 = por %p133, %p134
    %p137 = scmp.ne.s32.totalorder %s120, %s136
    %p138 = scmp.eq.s32.totalorder %s18, 0
    %p139 = por %p137, %p138
    %s140 = ssub.s32 %s19, %s31
    %p141 = scmp.eq.s32.totalorder %s140, 0
    %s143 = sadd.s32 %s142, 1
    %s144 = scalar_select %p141, %s142, %s143
    %p147 = pneg %p141
    %p148 = scmp.eq.s32.totalorder %s12, 1
    %p149 = por %p147, %p148
    %p150 = scmp.ne.s32.totalorder %s142, %s145
    %p151 = scmp.eq.s32.totalorder %s12, 0
    %p152 = por %p150, %p151
    %p153 = scmp.ne.s32.totalorder %s142, %s145
    %p154 = scmp.eq.s32.totalorder %s17, 1
    %p155 = por %p153, %p154
    %p156 = scmp.ne.s32.totalorder %s145, %s146
    %p157 = scmp.eq.s32.totalorder %s17, 0
    %p158 = por %p156, %p157
    %p159 = scmp.ne.s32.totalorder %s145, %s146
    %p160 = scmp.eq.s32.totalorder %s18, 1
    %p161 = por %p159, %p160
    %p163 = scmp.ne.s32.totalorder %s146, %s162
    %p164 = scmp.eq.s32.totalorder %s18, 0
    %p165 = por %p163, %p164
    %s166 = ssub.s32 %s19, %s31
    %p167 = scmp.eq.s32.totalorder %s166, 0
    %s169 = sadd.s32 %s168, 1
    %s170 = scalar_select %p167, %s168, %s169
    %p173 = pneg %p167
    %p174 = scmp.eq.s32.totalorder %s12, 1
    %p175 = por %p173, %p174
    %p176 = scmp.ne.s32.totalorder %s168, %s171
    %p177 = scmp.eq.s32.totalorder %s12, 0
    %p178 = por %p176, %p177
    %p179 = scmp.ne.s32.totalorder %s168, %s171
    %p180 = scmp.eq.s32.totalorder %s17, 1
    %p181 = por %p179, %p180
    %p182 = scmp.ne.s32.totalorder %s171, %s172
    %p183 = scmp.eq.s32.totalorder %s17, 0
    %p184 = por %p182, %p183
    %p185 = scmp.ne.s32.totalorder %s171, %s172
    %p186 = scmp.eq.s32.totalorder %s18, 1
    %p187 = por %p185, %p186
    %p189 = scmp.ne.s32.totalorder %s172, %s188
    %p190 = scmp.eq.s32.totalorder %s18, 0
    %p191 = por %p189, %p190
    %p192 = scmp.le.s32.totalorder 1, %s12
    %p193 = scmp.lt.s32.totalorder %s12, 3
    %p194 = pnand %p192, %p193
    %p195 = pneg %p194
    // Predicated region
    $region9: #{adaptive_loss_pallas.1} parent=5 // pred_check
      _
    $region10: #{adaptive_loss_pallas.1} parent=5 // pred_check_branch
      %197 = sbr.rel (%p194) target = $region12
    $region11: #{adaptive_loss_pallas.1} parent=5 // pred_region
      %s198 = ssub.s32 %s12, 1
    $region12: #{adaptive_loss_pallas.1} parent=5 // pred_fallthru
      _
    %p199 = scmp.lt.s32.totalorder %s12, 2
    // Predicated region
    $region13: #{adaptive_loss_pallas.1} parent=5 // pred_check
      %p200 = pneg %p199
    $region14: #{adaptive_loss_pallas.1} parent=5 // pred_check_branch
      %202 = sbr.rel (%p200) target = $region16
    $region15: #{adaptive_loss_pallas.1} parent=5 // pred_region
      // Predicated region
      $region17: #{adaptive_loss_pallas.1} parent=15 // pred_check
        %p203 = pneg %p46
      $region18: #{adaptive_loss_pallas.1} parent=15 // pred_check_branch
        %205 = sbr.rel (%p203) target = $region20
      $region19: #{adaptive_loss_pallas.1} parent=15 // pred_region
        %s206 = sadd.s32 %s19, %s20
        %p207 = scmp.lt.s32.totalorder %s206, 1
        %s208 = scalar_select %p207, %s206, 1
        %s209 = smul.addr %s208, 2
        %s210 = scalar_lea.vmem %s0, %s209
        %s211 = sadd.s32 %s19, %s20
      $region20: #{adaptive_loss_pallas.1} parent=15 // pred_fallthru
        _
      // Predicated region
      $region21: #{adaptive_loss_pallas.1} parent=15 // pred_check
        %p212 = pneg %p74
      $region22: #{adaptive_loss_pallas.1} parent=15 // pred_check_branch
        %214 = sbr.rel (%p212) target = $region24
      $region23: #{adaptive_loss_pallas.1} parent=15 // pred_region
        %s215 = sadd.s32 %s19, %s20
        %p216 = scmp.lt.s32.totalorder %s215, 1
        %s217 = scalar_select %p216, %s215, 1
        %s218 = smul.addr %s217, 8
        %s219 = scalar_lea.vmem %s1, %s218
        %s220 = sadd.s32 %s19, %s20
      $region24: #{adaptive_loss_pallas.1} parent=15 // pred_fallthru
        _
    $region16: #{adaptive_loss_pallas.1} parent=5 // pred_fallthru
      _
    %p221 = scmp.le.s32.totalorder 1, %s12
    %p222 = scmp.lt.s32.totalorder %s12, 3
    %p223 = pnand %p221, %p222
    %p224 = pneg %p223
    // Predicated region
    $region25: #{adaptive_loss_pallas.1} parent=5 // pred_check
      _
    $region26: #{adaptive_loss_pallas.1} parent=5 // pred_check_branch
      %226 = sbr.rel (%p223) target = $region28
    $region27: #{adaptive_loss_pallas.1} parent=5 // pred_region
      %s227 = ssub.s32 %s12, 1
      %s228 = sadd.s32 %s21, %s22
      %p229 = scmp.lt.s32.totalorder %s228, 1
      %s230 = scalar_select %p229, %s228, 1
      %s231 = smul.addr %s230, 2
      %s232 = scalar_lea.vmem %s0, %s231
      %p233 = pneg %p52
      %p234 = pneg %p49
      %s235 = sadd.s32 %s21, %s22
      %p236 = scmp.lt.s32.totalorder %s235, 1
      %s237 = scalar_select %p236, %s235, 1
      %s238 = smul.addr %s237, 8
      %s239 = scalar_lea.vmem %s1, %s238
      %p240 = pneg %p80
      %p241 = pneg %p77
      %p242 = pneg %p106
      %p243 = pneg %p103
      %p244 = scmp.lt.s32.totalorder %s21, 1
      %s245 = scalar_select %p244, %s21, 1
      %s246 = scalar_lea.vmem %s2, %s245
      %p247 = pneg %p132
      %p248 = pneg %p129
      %p249 = scmp.lt.s32.totalorder %s21, 1
      %s250 = scalar_select %p249, %s21, 1
      %s251 = scalar_lea.vmem %s3, %s250
      %p252 = pneg %p158
      %p253 = pneg %p155
      %p254 = scmp.lt.s32.totalorder %s21, 1
      %s255 = scalar_select %p254, %s21, 1
      %s256 = smul.addr %s255, 8
      %s257 = scalar_lea.vmem %s4, %s256
      %p258 = pneg %p184
      %p259 = pneg %p181
      %p260 = scmp.lt.s32.totalorder %s21, 1
      %s261 = scalar_select %p260, %s21, 1
      %s262 = smul.addr %s261, 8
      %s263 = scalar_lea.vmem %s5, %s262
      %s264 = sadd.s32 %s21, %s22
      %p265 = scmp.lt.s32.totalorder %s264, 1
      %s266 = scalar_select %p265, %s264, 1
      %s267 = smul.addr %s266, 2
      %s268 = scalar_lea.vmem %s0, %s267
      %s269 = sadd.s32 %s21, %s22
      %s270 = sadd.s32 %s21, %s22
      %p271 = scmp.lt.s32.totalorder %s270, 1
      %s272 = scalar_select %p271, %s270, 1
      %s273 = smul.addr %s272, 8
      %s274 = scalar_lea.vmem %s1, %s273
      %s275 = sadd.s32 %s21, %s22
      %p276 = scmp.lt.s32.totalorder %s21, 1
      %s277 = scalar_select %p276, %s21, 1
      %s278 = scalar_lea.vmem %s2, %s277
      %p279 = scmp.lt.s32.totalorder %s21, 1
      %s280 = scalar_select %p279, %s21, 1
      %s281 = scalar_lea.vmem %s3, %s280
      %p282 = scmp.lt.s32.totalorder %s21, 1
      %s283 = scalar_select %p282, %s21, 1
      %s284 = smul.addr %s283, 8
      %s285 = scalar_lea.vmem %s4, %s284
      %p286 = scmp.lt.s32.totalorder %s21, 1
      %s287 = scalar_select %p286, %s21, 1
      %s288 = smul.addr %s287, 8
      %s289 = scalar_lea.vmem %s5, %s288
      %p290 = scmp.eq.s32.totalorder %s22, 0
      // Predicated region
      $region29: #{adaptive_loss_pallas.1} parent=27 // pred_check
        %p291 = pneg %p290
      $region30: #{adaptive_loss_pallas.1} parent=27 // pred_check_branch
        %293 = sbr.rel (%p291) target = $region32
      $region31: #{adaptive_loss_pallas.1} parent=27 // pred_region
        %vm294 = vcmask 0
        %295 = vst.msk [vmem:[#allocation2] sm:$0x1] %vm294, 0.0
        %296 = vst.msk [vmem:[#allocation3] sm:$0x1] %vm294, 0.0
        %vm297 = vcmask 7168
        %298 = vst.msk [vmem:[#allocation4] sm:$0xff] %vm297, 0.0
        %299 = vst.msk [vmem:[#allocation5] sm:$0xff] %vm297, 0.0
      $region32: #{adaptive_loss_pallas.1} parent=27 // pred_fallthru
        _
      %v300 = vld [vmem:[%s268] sm:$0x1]
      %v301 = vld [vmem:[%s268 + $0x1] sm:$0x1]
      %v302 = vld [vmem:[%s274] sm:$0xff]
      %v303 = vsub.f32 %v300, %v301
      %v304 = vld [vmem:[#allocation2] sm:$0x1]
      %v305 = vmul.f32 %v303, %v303
      %vm306 = vcmask 1040384
      %v307 = vsel %vm306, %v305, 0.0
      %308 = vadd.xlane.f32.xlu0 %v307
      %v309 = vpop.xlane.xlu0 %308
      %v310 = vadd.f32 %v304, %v309
      %vm311 = vcmask 0
      %312 = vst.msk [vmem:[#allocation2] sm:$0x1] %vm311, %v310
      %v313 = vld [vmem:[#allocation3] sm:$0x1]
      %v314 = vsel %vm306, %v301, 0.0
      %315 = vadd.xlane.f32.xlu0 %v314
      %v316 = vpop.xlane.xlu0 %315
      %v317 = vadd.f32 %v313, %v316
      %318 = vst.msk [vmem:[#allocation3] sm:$0x1] %vm311, %v317
      %v319 = vld [vmem:[#allocation4] sm:$0xff]
      %320 = vadd.xlane.f32.xlu0 %v302
      %v321 = vpop.xlane.xlu0 %320
      %v322 = vadd.f32 %v319, %v321
      %vm323 = vcmask 7168
      %324 = vst.msk [vmem:[#allocation4] sm:$0xff] %vm323, %v322
      %v325 = vld [vmem:[#allocation5] sm:$0xff]
      %v326 = vlaneseq
      %v327 = vshrl.u32 %v326, 7
      %v328 = vsub.s32 0, %v327
      %v329 = vrot.slane %v301, %v328
      %v330 = vmul.f32 %v302, %v329
      %331 = vadd.xlane.f32.xlu0 %v330
      %v332 = vpop.xlane.xlu0 %331
      %v333 = vadd.f32 %v325, %v332
      %334 = vst.msk [vmem:[#allocation5] sm:$0xff] %vm323, %v333
      // Predicated region
      $region33: #{adaptive_loss_pallas.1} parent=27 // pred_check
        %p335 = pneg %p290
      $region34: #{adaptive_loss_pallas.1} parent=27 // pred_check_branch
        %337 = sbr.rel (%p335) target = $region36
      $region35: #{adaptive_loss_pallas.1} parent=27 // pred_region
        %v338 = vld [vmem:[#allocation2] sm:$0x1]
        %339 = vst.msk [vmem:[%s278] sm:$0x1] %vm311, %v338
        %v340 = vld [vmem:[#allocation3] sm:$0x1]
        %341 = vst.msk [vmem:[%s281] sm:$0x1] %vm311, %v340
        %v342 = vld [vmem:[#allocation4] sm:$0xff]
        %343 = vst.msk [vmem:[%s285] sm:$0xff] %vm323, %v342
        %v344 = vld [vmem:[#allocation5] sm:$0xff]
        %345 = vst.msk [vmem:[%s289] sm:$0xff] %vm323, %v344
      $region36: #{adaptive_loss_pallas.1} parent=27 // pred_fallthru
        _
      %p346 = scmp.lt.s32.totalorder %s21, 1
      %s347 = scalar_select %p346, %s21, 1
      %s348 = scalar_lea.vmem %s2, %s347
      %p349 = scmp.lt.s32.totalorder %s21, 1
      %s350 = scalar_select %p349, %s21, 1
      %s351 = scalar_lea.vmem %s3, %s350
      %p352 = scmp.lt.s32.totalorder %s21, 1
      %s353 = scalar_select %p352, %s21, 1
      %s354 = smul.addr %s353, 8
      %s355 = scalar_lea.vmem %s4, %s354
      %p356 = scmp.lt.s32.totalorder %s21, 1
      %s357 = scalar_select %p356, %s21, 1
      %s358 = smul.addr %s357, 8
      %s359 = scalar_lea.vmem %s5, %s358
      // Predicated region
      $region37: #{adaptive_loss_pallas.1} parent=27 // pred_check
        %p360 = pneg %p103
      $region38: #{adaptive_loss_pallas.1} parent=27 // pred_check_branch
        %362 = sbr.rel (%p360) target = $region40
      $region39: #{adaptive_loss_pallas.1} parent=27 // pred_region
        _
      $region40: #{adaptive_loss_pallas.1} parent=27 // pred_fallthru
        _
      // Predicated region
      $region41: #{adaptive_loss_pallas.1} parent=27 // pred_check
        %p363 = pneg %p129
      $region42: #{adaptive_loss_pallas.1} parent=27 // pred_check_branch
        %365 = sbr.rel (%p363) target = $region44
      $region43: #{adaptive_loss_pallas.1} parent=27 // pred_region
        _
      $region44: #{adaptive_loss_pallas.1} parent=27 // pred_fallthru
        _
      // Predicated region
      $region45: #{adaptive_loss_pallas.1} parent=27 // pred_check
        %p366 = pneg %p155
      $region46: #{adaptive_loss_pallas.1} parent=27 // pred_check_branch
        %368 = sbr.rel (%p366) target = $region48
      $region47: #{adaptive_loss_pallas.1} parent=27 // pred_region
        _
      $region48: #{adaptive_loss_pallas.1} parent=27 // pred_fallthru
        _
      // Predicated region
      $region49: #{adaptive_loss_pallas.1} parent=27 // pred_check
        %p369 = pneg %p181
      $region50: #{adaptive_loss_pallas.1} parent=27 // pred_check_branch
        %371 = sbr.rel (%p369) target = $region52
      $region51: #{adaptive_loss_pallas.1} parent=27 // pred_region
        _
      $region52: #{adaptive_loss_pallas.1} parent=27 // pred_fallthru
        _
    $region28: #{adaptive_loss_pallas.1} parent=5 // pred_fallthru
      _
    %p372 = scmp.le.s32.totalorder 2, %s12
    // Predicated region
    $region53: #{adaptive_loss_pallas.1} parent=5 // pred_check
      %p373 = pneg %p372
    $region54: #{adaptive_loss_pallas.1} parent=5 // pred_check_branch
      %375 = sbr.rel (%p373) target = $region56
    $region55: #{adaptive_loss_pallas.1} parent=5 // pred_region
      %s376 = ssub.s32 %s12, 2
      // Predicated region
      $region57: #{adaptive_loss_pallas.1} parent=55 // pred_check
        %p377 = pneg %p109
      $region58: #{adaptive_loss_pallas.1} parent=55 // pred_check_branch
        %379 = sbr.rel (%p377) target = $region60
      $region59: #{adaptive_loss_pallas.1} parent=55 // pred_region
        %p380 = scmp.lt.s32.totalorder %s23, 1
        %s381 = scalar_select %p380, %s23, 1
        %s382 = scalar_lea.vmem %s2, %s381
      $region60: #{adaptive_loss_pallas.1} parent=55 // pred_fallthru
        _
      // Predicated region
      $region61: #{adaptive_loss_pallas.1} parent=55 // pred_check
        %p383 = pneg %p135
      $region62: #{adaptive_loss_pallas.1} parent=55 // pred_check_branch
        %385 = sbr.rel (%p383) target = $region64
      $region63: #{adaptive_loss_pallas.1} parent=55 // pred_region
        %p386 = scmp.lt.s32.totalorder %s23, 1
        %s387 = scalar_select %p386, %s23, 1
        %s388 = scalar_lea.vmem %s3, %s387
      $region64: #{adaptive_loss_pallas.1} parent=55 // pred_fallthru
        _
      // Predicated region
      $region65: #{adaptive_loss_pallas.1} parent=55 // pred_check
        %p389 = pneg %p161
      $region66: #{adaptive_loss_pallas.1} parent=55 // pred_check_branch
        %391 = sbr.rel (%p389) target = $region68
      $region67: #{adaptive_loss_pallas.1} parent=55 // pred_region
        %p392 = scmp.lt.s32.totalorder %s23, 1
        %s393 = scalar_select %p392, %s23, 1
        %s394 = smul.addr %s393, 8
        %s395 = scalar_lea.vmem %s4, %s394
      $region68: #{adaptive_loss_pallas.1} parent=55 // pred_fallthru
        _
      // Predicated region
      $region69: #{adaptive_loss_pallas.1} parent=55 // pred_check
        %p396 = pneg %p187
      $region70: #{adaptive_loss_pallas.1} parent=55 // pred_check_branch
        %398 = sbr.rel (%p396) target = $region72
      $region71: #{adaptive_loss_pallas.1} parent=55 // pred_region
        %p399 = scmp.lt.s32.totalorder %s23, 1
        %s400 = scalar_select %p399, %s23, 1
        %s401 = smul.addr %s400, 8
        %s402 = scalar_lea.vmem %s5, %s401
      $region72: #{adaptive_loss_pallas.1} parent=55 // pred_fallthru
        _
    $region56: #{adaptive_loss_pallas.1} parent=5 // pred_fallthru
      _
  $region6: #{adaptive_loss_pallas.1} parent=0 // loop_footer
    %s16 = sadd.s32 1, %s12
  $region7: #{adaptive_loss_pallas.1} parent=0 // loop_footer_branch
    %11 = sbr.rel target = $region3
  $region8: #{adaptive_loss_pallas.1} parent=0 // loop_exit
    _

</llo_original>
